<compile_context>
chip_gen: v6e
topology: v6e:2x2x1
jax: 0.10.0
libtpu: 0.0.40
codegen_flags: <defaults>
</compile_context>

<pallas_src>
import jax
import jax.numpy as jnp
from jax.experimental import pallas as pl
from jax.experimental.pallas import tpu as pltpu


def _round_up(x, m):
    return (x + m - 1) // m * m


def _outconv_kernel_mxu(x_ref, w_ref, b_ref, o_ref):
    # x_ref: (Cin, t_hw) VMEM   w_ref: (Cout, Cin) VMEM   b_ref: (Cout, 1) VMEM
    # o_ref: (Cout, t_hw) VMEM
    y = jnp.dot(w_ref[...], x_ref[...], preferred_element_type=jnp.float32)
    y = y + b_ref[...]                       # broadcast bias over the lane axis
    o_ref[...] = jnp.maximum(y, 0.0).astype(o_ref.dtype)


def _outconv_kernel_vpu(x_ref, w_ref, b_ref, o_ref):
    # Tiny-channel path: x_ref: (Cin, t_hw) VMEM; w_ref: (Cout, Cin) f32 SMEM;
    # b_ref: (Cout,) f32 SMEM; o_ref: (Cout, t_hw) VMEM.
    # Cout*Cin scalar-broadcast FMAs on the VPU; no MXU involvement.  Fully
    # unrolled (static, <= 64 terms).
    cout, cin = w_ref.shape
    for o in range(cout):
        acc = x_ref[0, :].astype(jnp.float32) * w_ref[o, 0]
        for c in range(1, cin):
            acc = acc + x_ref[c, :].astype(jnp.float32) * w_ref[o, c]
        o_ref[o, :] = jnp.maximum(acc + b_ref[o], 0.0).astype(o_ref.dtype)


def out_conv(x_nchw, weight, bias, *, hbm_dtype=None):
    """1x1 conv + ReLU (PyTorch OutConv forward).

    x_nchw: (N, C_in, H, W)
    weight: (C_out, C_in, 1, 1)  (torch.nn.Conv2d layout)
    bias:   (C_out,)
    hbm_dtype: optional narrower dtype (e.g. jnp.bfloat16) for x/weight HBM
        traffic + MXU inputs; accumulation stays f32.  Loosens tolerance vs a
        f32 reference to ~1e-2 relative.  None keeps the input dtype exactly.
    returns (N, C_out, H, W) in x_nchw.dtype
    """
    N, Cin, H, W = x_nchw.shape
    Cout = weight.shape[0]
    HW = H * W
    out_dtype = x_nchw.dtype
    in_dtype = hbm_dtype if hbm_dtype is not None else x_nchw.dtype
    in_itemsize = jnp.dtype(in_dtype).itemsize
    out_itemsize = jnp.dtype(out_dtype).itemsize

    # Channels-first view: pure reshape of contiguous NCHW — no transpose.
    x3d = x_nchw.reshape(N, Cin, HW).astype(in_dtype)
    w2d = weight.reshape(Cout, Cin)

    # ---- generation-aware VMEM budget --------------------------------------
    try:
        phys_vmem = int(pltpu.get_tpu_info().vmem_capacity_bytes)
    except Exception:
        phys_vmem = 64 * 1024 * 1024             # conservative: v7x per-TC VMEM
    small_vmem = phys_vmem <= 64 * 1024 * 1024
    tile_budget = (24 if small_vmem else 48) * 1024 * 1024
    vmem_cap = (32 if small_vmem else 64) * 1024 * 1024

    # ---- spatial tile: as large as the budget allows (<= 32K lanes) ---------
    # Per-lane footprint: x tile (Cin rows) + out tile (Cout rows), each
    # double-buffered by the BlockSpec pipeline.
    bytes_per_lane = 2 * (Cin * in_itemsize + Cout * out_itemsize)
    max_lanes = tile_budget // max(bytes_per_lane, 1)
    max_lanes = max(128, min((max_lanes // 128) * 128, 32768))

    if HW <= max_lanes:
        t_hw, n_tiles = HW, 1                    # full extent (ok even if not %128)
    else:
        t_hw = int(max_lanes)                    # multiple of 128; ragged tail ok
        n_tiles = pl.cdiv(HW, t_hw)

    # v7x megacore: prefer an even total grid-point count so both TensorCores
    # get equal work (no-op on single-TC v5e/v6e).
    if (N * n_tiles) % 2 == 1 and HW > 128:
        nt2 = n_tiles + 1
        t2 = _round_up(pl.cdiv(HW, nt2), 128)
        if pl.cdiv(HW, t2) == nt2:
            t_hw, n_tiles = t2, nt2

    grid = (N, n_tiles)

    # Explicit scoped-VMEM limit: actual tile footprint + headroom, capped per
    # generation (tile_bytes already includes the 2x double buffering).
    tile_bytes = int(bytes_per_lane) * int(t_hw) + (Cin * Cout + Cout) * 4
    vmem_limit = int(min(max(tile_bytes + (4 << 20), 16 << 20), vmem_cap))

    compiler_params = pltpu.CompilerParams(
        dimension_semantics=("parallel", "parallel"),
        vmem_limit_bytes=vmem_limit,
    )

    x_spec = pl.BlockSpec((None, Cin, t_hw), lambda n, j: (n, 0, j))
    o_spec = pl.BlockSpec((None, Cout, t_hw), lambda n, j: (n, 0, j))
    out_shape = jax.ShapeDtypeStruct((N, Cout, HW), out_dtype)

    # NOTE: weight/bias index_maps are constant, so they stay resident across
    # the whole grid.  If this head were ever used with Cout >= 128, add a third
    # "parallel" grid axis tiling Cout (tn multiple of 128, bias tiled (tn, 1))
    # instead of growing the resident weight / f32 intermediate.
    if Cin <= 8 and Cout <= 8:
        # Tiny channels: VPU path, weight/bias as f32 scalars in SMEM.
        out3d = pl.pallas_call(
            _outconv_kernel_vpu,
            out_shape=out_shape,
            grid_spec=pltpu.PrefetchScalarGridSpec(
                num_scalar_prefetch=0,
                grid=grid,
                in_specs=[
                    x_spec,
                    pl.BlockSpec(memory_space=pltpu.MemorySpace.SMEM),
                    pl.BlockSpec(memory_space=pltpu.MemorySpace.SMEM),
                ],
                out_specs=o_spec,
            ),
            compiler_params=compiler_params,
        )(x3d, w2d.astype(jnp.float32), bias.astype(jnp.float32))
    else:
        # General path: (Cout, Cin) @ (Cin, t_hw) on the MXU, f32 accumulation.
        out3d = pl.pallas_call(
            _outconv_kernel_mxu,
            out_shape=out_shape,
            grid_spec=pltpu.PrefetchScalarGridSpec(
                num_scalar_prefetch=0,
                grid=grid,
                in_specs=[
                    x_spec,
                    pl.BlockSpec((Cout, Cin), lambda n, j: (0, 0)),
                    pl.BlockSpec((Cout, 1), lambda n, j: (0, 0)),
                ],
                out_specs=o_spec,
            ),
            compiler_params=compiler_params,
        )(x3d, w2d.astype(in_dtype), bias.reshape(Cout, 1).astype(jnp.float32))

    # (N, Cout, H*W) -> (N, Cout, H, W): free reshape, matches PyTorch NCHW.
    return out3d.reshape(N, Cout, H, W)


if __name__ == "__main__":
    key = jax.random.PRNGKey(0)
    k_x, k_w, k_b = jax.random.split(key, 3)

    # Test 1: shapes implied by the module spec (tiny channels -> VPU/SMEM path).
    N, Cin, H, W = 2, 4, 16, 16
    Cout = 3
    x = jax.random.normal(k_x, (N, Cin, H, W), dtype=jnp.float32)
    weight = jax.random.normal(k_w, (Cout, Cin, 1, 1), dtype=jnp.float32) * 0.1
    bias = jax.random.normal(k_b, (Cout,), dtype=jnp.float32) * 0.1

    out = jax.block_until_ready(out_conv(x, weight, bias))
    ref = jnp.einsum("nchw,oc->nohw", x, weight.reshape(Cout, Cin))
    ref = jnp.maximum(ref + bias[None, :, None, None], 0.0)
    assert out.shape == (N, Cout, H, W)
    assert jnp.allclose(out, ref, atol=1e-5, rtol=1e-5)

    # Test 2: larger channel counts (MXU path; odd grid gets megacore-evened).
    k_x2, k_w2, k_b2 = jax.random.split(jax.random.PRNGKey(0), 3)
    N2, Cin2, Cout2, H2, W2 = 1, 32, 16, 16, 16
    x2 = jax.random.normal(k_x2, (N2, Cin2, H2, W2), dtype=jnp.float32)
    w2 = jax.random.normal(k_w2, (Cout2, Cin2, 1, 1), dtype=jnp.float32) * 0.1
    b2 = jax.random.normal(k_b2, (Cout2,), dtype=jnp.float32) * 0.1

    out2 = jax.block_until_ready(out_conv(x2, w2, b2))
    ref2 = jnp.einsum("nchw,oc->nohw", x2, w2.reshape(Cout2, Cin2))
    ref2 = jnp.maximum(ref2 + b2[None, :, None, None], 0.0)
    assert out2.shape == (N2, Cout2, H2, W2)
    assert jnp.allclose(out2, ref2, atol=1e-4, rtol=1e-4)

    print("KERNEL_OK")
</pallas_src>

<mosaic_0001>
module attributes {stable_mosaic.version = 11 : i64} {
  func.func @_outconv_kernel_vpu(%arg0: i32, %arg1: i32, %arg2: memref<1x4x256xf32, #tpu.memory_space<vmem>>, %arg3: memref<3x4xf32, #tpu.memory_space<smem>>, %arg4: memref<3xf32, #tpu.memory_space<smem>>, %arg5: memref<1x3x256xf32, #tpu.memory_space<vmem>>) attributes {dimension_semantics = [#tpu.dimension_semantics<parallel>, #tpu.dimension_semantics<parallel>], iteration_bounds = array<i64: 2, 1>, scalar_prefetch = 0 : i64, scratch_operands = 0 : i64, tpu.core_type = #tpu.core_type<tc>, window_params = [{transform_indices = @transform_0, window_bounds = array<i64: 1, 4, 256>}, {transform_indices = @transform_1, window_bounds = array<i64: 3, 4>}, {transform_indices = @transform_2, window_bounds = array<i64: 3>}, {transform_indices = @transform_3, window_bounds = array<i64: 1, 3, 256>}]} {
    %c0 = arith.constant 0 : index
    %c0_0 = arith.constant 0 : index
    %c0_1 = arith.constant 0 : index
    %0 = vector.load %arg2[%c0, %c0_0, %c0_1] : memref<1x4x256xf32, #tpu.memory_space<vmem>>, vector<1x1x256xf32>
    %1 = vector.shape_cast %0 : vector<1x1x256xf32> to vector<256xf32>
    %c0_2 = arith.constant 0 : index
    %c0_3 = arith.constant 0 : index
    %2 = memref.load %arg3[%c0_2, %c0_3] : memref<3x4xf32, #tpu.memory_space<smem>>
    %3 = vector.broadcast %2 : f32 to vector<256xf32>
    %4 = arith.mulf %1, %3 : vector<256xf32>
    %c0_4 = arith.constant 0 : index
    %c1 = arith.constant 1 : index
    %c0_5 = arith.constant 0 : index
    %5 = vector.load %arg2[%c0_4, %c1, %c0_5] : memref<1x4x256xf32, #tpu.memory_space<vmem>>, vector<1x1x256xf32>
    %6 = vector.shape_cast %5 : vector<1x1x256xf32> to vector<256xf32>
    %c0_6 = arith.constant 0 : index
    %c1_7 = arith.constant 1 : index
    %7 = memref.load %arg3[%c0_6, %c1_7] : memref<3x4xf32, #tpu.memory_space<smem>>
    %8 = vector.broadcast %7 : f32 to vector<256xf32>
    %9 = arith.mulf %6, %8 : vector<256xf32>
    %10 = arith.addf %4, %9 : vector<256xf32>
    %c0_8 = arith.constant 0 : index
    %c2 = arith.constant 2 : index
    %c0_9 = arith.constant 0 : index
    %11 = vector.load %arg2[%c0_8, %c2, %c0_9] : memref<1x4x256xf32, #tpu.memory_space<vmem>>, vector<1x1x256xf32>
    %12 = vector.shape_cast %11 : vector<1x1x256xf32> to vector<256xf32>
    %c0_10 = arith.constant 0 : index
    %c2_11 = arith.constant 2 : index
    %13 = memref.load %arg3[%c0_10, %c2_11] : memref<3x4xf32, #tpu.memory_space<smem>>
    %14 = vector.broadcast %13 : f32 to vector<256xf32>
    %15 = arith.mulf %12, %14 : vector<256xf32>
    %16 = arith.addf %10, %15 : vector<256xf32>
    %c0_12 = arith.constant 0 : index
    %c3 = arith.constant 3 : index
    %c0_13 = arith.constant 0 : index
    %17 = vector.load %arg2[%c0_12, %c3, %c0_13] : memref<1x4x256xf32, #tpu.memory_space<vmem>>, vector<1x1x256xf32>
    %18 = vector.shape_cast %17 : vector<1x1x256xf32> to vector<256xf32>
    %c0_14 = arith.constant 0 : index
    %c3_15 = arith.constant 3 : index
    %19 = memref.load %arg3[%c0_14, %c3_15] : memref<3x4xf32, #tpu.memory_space<smem>>
    %20 = vector.broadcast %19 : f32 to vector<256xf32>
    %21 = arith.mulf %18, %20 : vector<256xf32>
    %22 = arith.addf %16, %21 : vector<256xf32>
    %c0_16 = arith.constant 0 : index
    %23 = memref.load %arg4[%c0_16] : memref<3xf32, #tpu.memory_space<smem>>
    %24 = vector.broadcast %23 : f32 to vector<256xf32>
    %25 = arith.addf %22, %24 : vector<256xf32>
    %cst = arith.constant 0.000000e+00 : f32
    %26 = vector.broadcast %cst : f32 to vector<256xf32>
    %27 = arith.maximumf %25, %26 : vector<256xf32>
    %c0_17 = arith.constant 0 : index
    %c0_18 = arith.constant 0 : index
    %c0_19 = arith.constant 0 : index
    %28 = vector.load %arg5[%c0_17, %c0_18, %c0_19] : memref<1x3x256xf32, #tpu.memory_space<vmem>>, vector<1x1x256xf32>
    %29 = vector.shape_cast %28 : vector<1x1x256xf32> to vector<256xf32>
    %30 = vector.shape_cast %27 : vector<256xf32> to vector<1x1x256xf32>
    tpu.vector_store %arg5[%c0_17, %c0_18, %c0_19], %30 {strides = array<i32>} : memref<1x3x256xf32, #tpu.memory_space<vmem>>, vector<1x1x256xf32>,
    %c0_20 = arith.constant 0 : index
    %c0_21 = arith.constant 0 : index
    %c0_22 = arith.constant 0 : index
    %31 = vector.load %arg2[%c0_20, %c0_21, %c0_22] : memref<1x4x256xf32, #tpu.memory_space<vmem>>, vector<1x1x256xf32>
    %32 = vector.shape_cast %31 : vector<1x1x256xf32> to vector<256xf32>
    %c1_23 = arith.constant 1 : index
    %c0_24 = arith.constant 0 : index
    %33 = memref.load %arg3[%c1_23, %c0_24] : memref<3x4xf32, #tpu.memory_space<smem>>
    %34 = vector.broadcast %33 : f32 to vector<256xf32>
    %35 = arith.mulf %32, %34 : vector<256xf32>
    %c0_25 = arith.constant 0 : index
    %c1_26 = arith.constant 1 : index
    %c0_27 = arith.constant 0 : index
    %36 = vector.load %arg2[%c0_25, %c1_26, %c0_27] : memref<1x4x256xf32, #tpu.memory_space<vmem>>, vector<1x1x256xf32>
    %37 = vector.shape_cast %36 : vector<1x1x256xf32> to vector<256xf32>
    %c1_28 = arith.constant 1 : index
    %c1_29 = arith.constant 1 : index
    %38 = memref.load %arg3[%c1_28, %c1_29] : memref<3x4xf32, #tpu.memory_space<smem>>
    %39 = vector.broadcast %38 : f32 to vector<256xf32>
    %40 = arith.mulf %37, %39 : vector<256xf32>
    %41 = arith.addf %35, %40 : vector<256xf32>
    %c0_30 = arith.constant 0 : index
    %c2_31 = arith.constant 2 : index
    %c0_32 = arith.constant 0 : index
    %42 = vector.load %arg2[%c0_30, %c2_31, %c0_32] : memref<1x4x256xf32, #tpu.memory_space<vmem>>, vector<1x1x256xf32>
    %43 = vector.shape_cast %42 : vector<1x1x256xf32> to vector<256xf32>
    %c1_33 = arith.constant 1 : index
    %c2_34 = arith.constant 2 : index
    %44 = memref.load %arg3[%c1_33, %c2_34] : memref<3x4xf32, #tpu.memory_space<smem>>
    %45 = vector.broadcast %44 : f32 to vector<256xf32>
    %46 = arith.mulf %43, %45 : vector<256xf32>
    %47 = arith.addf %41, %46 : vector<256xf32>
    %c0_35 = arith.constant 0 : index
    %c3_36 = arith.constant 3 : index
    %c0_37 = arith.constant 0 : index
    %48 = vector.load %arg2[%c0_35, %c3_36, %c0_37] : memref<1x4x256xf32, #tpu.memory_space<vmem>>, vector<1x1x256xf32>
    %49 = vector.shape_cast %48 : vector<1x1x256xf32> to vector<256xf32>
    %c1_38 = arith.constant 1 : index
    %c3_39 = arith.constant 3 : index
    %50 = memref.load %arg3[%c1_38, %c3_39] : memref<3x4xf32, #tpu.memory_space<smem>>
    %51 = vector.broadcast %50 : f32 to vector<256xf32>
    %52 = arith.mulf %49, %51 : vector<256xf32>
    %53 = arith.addf %47, %52 : vector<256xf32>
    %c1_40 = arith.constant 1 : index
    %54 = memref.load %arg4[%c1_40] : memref<3xf32, #tpu.memory_space<smem>>
    %55 = vector.broadcast %54 : f32 to vector<256xf32>
    %56 = arith.addf %53, %55 : vector<256xf32>
    %cst_41 = arith.constant 0.000000e+00 : f32
    %57 = vector.broadcast %cst_41 : f32 to vector<256xf32>
    %58 = arith.maximumf %56, %57 : vector<256xf32>
    %c0_42 = arith.constant 0 : index
    %c1_43 = arith.constant 1 : index
    %c0_44 = arith.constant 0 : index
    %59 = vector.load %arg5[%c0_42, %c1_43, %c0_44] : memref<1x3x256xf32, #tpu.memory_space<vmem>>, vector<1x1x256xf32>
    %60 = vector.shape_cast %59 : vector<1x1x256xf32> to vector<256xf32>
    %61 = vector.shape_cast %58 : vector<256xf32> to vector<1x1x256xf32>
    tpu.vector_store %arg5[%c0_42, %c1_43, %c0_44], %61 {strides = array<i32>} : memref<1x3x256xf32, #tpu.memory_space<vmem>>, vector<1x1x256xf32>,
    %c0_45 = arith.constant 0 : index
    %c0_46 = arith.constant 0 : index
    %c0_47 = arith.constant 0 : index
    %62 = vector.load %arg2[%c0_45, %c0_46, %c0_47] : memref<1x4x256xf32, #tpu.memory_space<vmem>>, vector<1x1x256xf32>
    %63 = vector.shape_cast %62 : vector<1x1x256xf32> to vector<256xf32>
    %c2_48 = arith.constant 2 : index
    %c0_49 = arith.constant 0 : index
    %64 = memref.load %arg3[%c2_48, %c0_49] : memref<3x4xf32, #tpu.memory_space<smem>>
    %65 = vector.broadcast %64 : f32 to vector<256xf32>
    %66 = arith.mulf %63, %65 : vector<256xf32>
    %c0_50 = arith.constant 0 : index
    %c1_51 = arith.constant 1 : index
    %c0_52 = arith.constant 0 : index
    %67 = vector.load %arg2[%c0_50, %c1_51, %c0_52] : memref<1x4x256xf32, #tpu.memory_space<vmem>>, vector<1x1x256xf32>
    %68 = vector.shape_cast %67 : vector<1x1x256xf32> to vector<256xf32>
    %c2_53 = arith.constant 2 : index
    %c1_54 = arith.constant 1 : index
    %69 = memref.load %arg3[%c2_53, %c1_54] : memref<3x4xf32, #tpu.memory_space<smem>>
    %70 = vector.broadcast %69 : f32 to vector<256xf32>
    %71 = arith.mulf %68, %70 : vector<256xf32>
    %72 = arith.addf %66, %71 : vector<256xf32>
    %c0_55 = arith.constant 0 : index
    %c2_56 = arith.constant 2 : index
    %c0_57 = arith.constant 0 : index
    %73 = vector.load %arg2[%c0_55, %c2_56, %c0_57] : memref<1x4x256xf32, #tpu.memory_space<vmem>>, vector<1x1x256xf32>
    %74 = vector.shape_cast %73 : vector<1x1x256xf32> to vector<256xf32>
    %c2_58 = arith.constant 2 : index
    %c2_59 = arith.constant 2 : index
    %75 = memref.load %arg3[%c2_58, %c2_59] : memref<3x4xf32, #tpu.memory_space<smem>>
    %76 = vector.broadcast %75 : f32 to vector<256xf32>
    %77 = arith.mulf %74, %76 : vector<256xf32>
    %78 = arith.addf %72, %77 : vector<256xf32>
    %c0_60 = arith.constant 0 : index
    %c3_61 = arith.constant 3 : index
    %c0_62 = arith.constant 0 : index
    %79 = vector.load %arg2[%c0_60, %c3_61, %c0_62] : memref<1x4x256xf32, #tpu.memory_space<vmem>>, vector<1x1x256xf32>
    %80 = vector.shape_cast %79 : vector<1x1x256xf32> to vector<256xf32>
    %c2_63 = arith.constant 2 : index
    %c3_64 = arith.constant 3 : index
    %81 = memref.load %arg3[%c2_63, %c3_64] : memref<3x4xf32, #tpu.memory_space<smem>>
    %82 = vector.broadcast %81 : f32 to vector<256xf32>
    %83 = arith.mulf %80, %82 : vector<256xf32>
    %84 = arith.addf %78, %83 : vector<256xf32>
    %c2_65 = arith.constant 2 : index
    %85 = memref.load %arg4[%c2_65] : memref<3xf32, #tpu.memory_space<smem>>
    %86 = vector.broadcast %85 : f32 to vector<256xf32>
    %87 = arith.addf %84, %86 : vector<256xf32>
    %cst_66 = arith.constant 0.000000e+00 : f32
    %88 = vector.broadcast %cst_66 : f32 to vector<256xf32>
    %89 = arith.maximumf %87, %88 : vector<256xf32>
    %c0_67 = arith.constant 0 : index
    %c2_68 = arith.constant 2 : index
    %c0_69 = arith.constant 0 : index
    %90 = vector.load %arg5[%c0_67, %c2_68, %c0_69] : memref<1x3x256xf32, #tpu.memory_space<vmem>>, vector<1x1x256xf32>
    %91 = vector.shape_cast %90 : vector<1x1x256xf32> to vector<256xf32>
    %92 = vector.shape_cast %89 : vector<256xf32> to vector<1x1x256xf32>
    tpu.vector_store %arg5[%c0_67, %c2_68, %c0_69], %92 {strides = array<i32>} : memref<1x3x256xf32, #tpu.memory_space<vmem>>, vector<1x1x256xf32>,
    return
  }
  func.func @transform_0(%arg0: i32, %arg1: i32) -> (i32, i32, i32) {
    %c0_i32 = arith.constant 0 : i32
    %c0_i32_0 = arith.constant 0 : i32
    return %arg0, %c0_i32, %arg1 : i32, i32, i32
  }
  func.func @transform_1(%arg0: i32, %arg1: i32) -> (i32, i32) {
    %c0_i32 = arith.constant 0 : i32
    %c0_i32_0 = arith.constant 0 : i32
    %c0_i32_1 = arith.constant 0 : i32
    return %c0_i32, %c0_i32_0 : i32, i32
  }
  func.func @transform_2(%arg0: i32, %arg1: i32) -> i32 {
    %c0_i32 = arith.constant 0 : i32
    %c0_i32_0 = arith.constant 0 : i32
    return %c0_i32 : i32
  }
  func.func @transform_3(%arg0: i32, %arg1: i32) -> (i32, i32, i32) {
    %c0_i32 = arith.constant 0 : i32
    %c0_i32_0 = arith.constant 0 : i32
    return %arg0, %c0_i32, %arg1 : i32, i32, i32
  }
}

</mosaic_0001>

<llo_original>
// kernel: tpu_custom_call.1
$region0: #{tpu_custom_call.1}
  #allocation0 [shape = 'u32[]', space=smem, size = 0x4, offset = 0x4, fixed_abs, tag = 'smem constant byte address 0x4 - core index']
  #allocation1 [shape = 'u32[144,128]{1,0:T(1,128)}', space=vmem, size = 0x12000, scoped, tag = 'internal scratch']
  %s0 = inlined_call_operand.hbm [shape: f32[2,4,256], index: 0, kind: input, shape index: {}]
  %s1 = inlined_call_operand.hbm [shape: f32[3,4], index: 1, kind: input, shape index: {}]
  %s2 = inlined_call_operand.vmem [shape: f32[3], index: 2, kind: input, shape index: {}]
  %s3 = inlined_call_operand.vmem [shape: f32[2,3,256], index: 3, kind: output, shape index: {}]
  %s4 = sld [smem:[#allocation0]]
  $region57: #{tpu_custom_call.1} parent=0
    _
  %s6 = ssub.s32 1, %s4
  %s7 = scalar_select 0, %s6, %s4
  $region1: #{tpu_custom_call.1} parent=0
    #allocation2 [shape = 'u8[8192]{0}', space=vmem, size = 0x2000, scoped, tag = 'input window, operand 0']
    #allocation3 [shape = 's32[2]{0}', space=sflag, size = 0x8, scoped, tag = 'scoped memory for tpu_custom_call.1']
    #allocation4 [shape = 's32[2]{0}', space=sflag, size = 0x8, scoped, tag = 'scoped memory for tpu_custom_call.1']
    #allocation5 [shape = 's32[2]{0}', space=sflag, size = 0x8, scoped, tag = 'scoped memory for tpu_custom_call.1']
    #allocation6 [shape = 'u8[2048]{0}', space=smem, size = 0x800, scoped, tag = 'input window, operand 1, single buffered']
    #allocation7 [shape = 'u8[512]{0}', space=smem, size = 0x200, scoped, tag = 'input window, operand 2, single buffered']
    %8 = vsyncpa [#allocation3], 0
    %s9 = scalar_lea.sflag [#allocation3], 1
    %10 = vsyncpa %s9, 0
    %11 = vsyncpa [#allocation4], 0
    %12 = vsyncpa [#allocation5], 0
    loop: start=0, step=1, limit=4
    $region2: #{tpu_custom_call.1} parent=1 // loop_pre_header
      _
    $region3: #{tpu_custom_call.1} parent=1 // loop_header
      %s14 = sphi 0, %s18
      %p15 = scmp.ge.s32.totalorder %s14, 4
      %s21 = sphi 0, %s33
      %s22 = sphi 0, %s29
      %s23 = sphi 0, %s21
      %s24 = sphi 0, %s22
      %s25 = sphi 0, %s23
      %s26 = sphi 0, %s24
      %s38 = sphi 0, %s40
      %s41 = sphi 0, %s38
      %s42 = sphi 0, %s41
      %s58 = sphi 0, %s42
      %s62 = sphi 0, %s62
      %s64 = sphi 0, %s62
      %s65 = sphi 0, %s64
      %s79 = sphi 0, %s65
      %s83 = sphi 0, %s83
      %s85 = sphi 0, %s83
      %s86 = sphi 0, %s85
      %s100 = sphi 0, %s86
      %s108 = sphi 0, %s110
      %s111 = sphi 0, %s108
      %s112 = sphi 0, %s111
      %s128 = sphi 0, %s112
    $region4: #{tpu_custom_call.1} parent=1 // loop_header_branch
      %17 = sbr.rel (%p15) target = $region8
    $region5: #{tpu_custom_call.1} parent=1 // loop_body
      %s19 = ssub.s32 %s14, 1
      %s20 = ssub.s32 %s14, 2
      %s27 = sadd.s32 1, %s22
      %p28 = scmp.ge.s32.totalorder %s27, 1
      %s29 = scalar_select %p28, 0, %s27
      %s30 = sadd.s32 1, %s21
      %s31 = scalar_select %p28, %s30, %s21
      %p32 = scmp.ge.s32.totalorder %s31, 2
      %s33 = scalar_select %p32, 0, %s31
      %s34 = ssub.s32 %s21, %s33
      %s35 = ssub.s32 %s22, %s29
      %s36 = sor.u32 %s34, %s35
      %p37 = scmp.eq.s32.totalorder %s36, 0
      %s39 = sadd.s32 %s38, 1
      %s40 = scalar_select %p37, %s38, %s39
      %p43 = pneg %p37
      %p44 = scmp.eq.s32.totalorder %s14, 1
      %p45 = por %p43, %p44
      %p46 = scmp.ne.s32.totalorder %s38, %s41
      %p47 = scmp.eq.s32.totalorder %s14, 0
      %p48 = por %p46, %p47
      %p49 = scmp.ne.s32.totalorder %s38, %s41
      %p50 = scmp.eq.s32.totalorder %s19, 1
      %p51 = por %p49, %p50
      %p52 = scmp.ne.s32.totalorder %s41, %s42
      %p53 = scmp.eq.s32.totalorder %s19, 0
      %p54 = por %p52, %p53
      %p55 = scmp.ne.s32.totalorder %s41, %s42
      %p56 = scmp.eq.s32.totalorder %s20, 1
      %p57 = por %p55, %p56
      %p59 = scmp.ne.s32.totalorder %s42, %s58
      %p60 = scmp.eq.s32.totalorder %s20, 0
      %p61 = por %p59, %p60
      %s63 = sadd.s32 %s62, 1
      %p66 = scmp.eq.s32.totalorder %s14, 1
      %p67 = scmp.ne.s32.totalorder %s62, %s64
      %p68 = scmp.eq.s32.totalorder %s14, 0
      %p69 = por %p67, %p68
      %p70 = scmp.ne.s32.totalorder %s62, %s64
      %p71 = scmp.eq.s32.totalorder %s19, 1
      %p72 = por %p70, %p71
      %p73 = scmp.ne.s32.totalorder %s64, %s65
      %p74 = scmp.eq.s32.totalorder %s19, 0
      %p75 = por %p73, %p74
      %p76 = scmp.ne.s32.totalorder %s64, %s65
      %p77 = scmp.eq.s32.totalorder %s20, 1
      %p78 = por %p76, %p77
      %p80 = scmp.ne.s32.totalorder %s65, %s79
      %p81 = scmp.eq.s32.totalorder %s20, 0
      %p82 = por %p80, %p81
      %s84 = sadd.s32 %s83, 1
      %p87 = scmp.eq.s32.totalorder %s14, 1
      %p88 = scmp.ne.s32.totalorder %s83, %s85
      %p89 = scmp.eq.s32.totalorder %s14, 0
      %p90 = por %p88, %p89
      %p91 = scmp.ne.s32.totalorder %s83, %s85
      %p92 = scmp.eq.s32.totalorder %s19, 1
      %p93 = por %p91, %p92
      %p94 = scmp.ne.s32.totalorder %s85, %s86
      %p95 = scmp.eq.s32.totalorder %s19, 0
      %p96 = por %p94, %p95
      %p97 = scmp.ne.s32.totalorder %s85, %s86
      %p98 = scmp.eq.s32.totalorder %s20, 1
      %p99 = por %p97, %p98
      %p101 = scmp.ne.s32.totalorder %s86, %s100
      %p102 = scmp.eq.s32.totalorder %s20, 0
      %p103 = por %p101, %p102
      %s104 = ssub.s32 %s21, %s33
      %s105 = ssub.s32 %s22, %s29
      %s106 = sor.u32 %s104, %s105
      %p107 = scmp.eq.s32.totalorder %s106, 0
      %s109 = sadd.s32 %s108, 1
      %s110 = scalar_select %p107, %s108, %s109
      %p113 = pneg %p107
      %p114 = scmp.eq.s32.totalorder %s14, 1
      %p115 = por %p113, %p114
      %p116 = scmp.ne.s32.totalorder %s108, %s111
      %p117 = scmp.eq.s32.totalorder %s14, 0
      %p118 = por %p116, %p117
      %p119 = scmp.ne.s32.totalorder %s108, %s111
      %p120 = scmp.eq.s32.totalorder %s19, 1
      %p121 = por %p119, %p120
      %p122 = scmp.ne.s32.totalorder %s111, %s112
      %p123 = scmp.eq.s32.totalorder %s19, 0
      %p124 = por %p122, %p123
      %p125 = scmp.ne.s32.totalorder %s111, %s112
      %p126 = scmp.eq.s32.totalorder %s20, 1
      %p127 = por %p125, %p126
      %p129 = scmp.ne.s32.totalorder %s112, %s128
      %p130 = scmp.eq.s32.totalorder %s20, 0
      %p131 = por %p129, %p130
      %p132 = scmp.le.s32.totalorder 1, %s14
      %p133 = scmp.lt.s32.totalorder %s14, 3
      %p134 = pnand %p132, %p133
      %p135 = pneg %p134
      // Predicated region
      $region9: #{tpu_custom_call.1} parent=5 // pred_check
        _
      $region10: #{tpu_custom_call.1} parent=5 // pred_check_branch
        %137 = sbr.rel (%p134) target = $region12
      $region11: #{tpu_custom_call.1} parent=5 // pred_region
        %s138 = ssub.s32 %s14, 1
        // Predicated region
        $region13: #{tpu_custom_call.1} parent=11 // pred_check
          %p139 = pneg %p75
        $region14: #{tpu_custom_call.1} parent=11 // pred_check_branch
          %141 = sbr.rel (%p139) target = $region16
        $region15: #{tpu_custom_call.1} parent=11 // pred_region
          %s143 = ssub.s32 64, 64
          %144 = vsyncadd [#allocation4], %s143
          %147 = dma.hbm_to_smem %s1, 64, [#allocation6], [#allocation4]
        $region16: #{tpu_custom_call.1} parent=11 // pred_fallthru
          _
        // Predicated region
        $region17: #{tpu_custom_call.1} parent=11 // pred_check
          %p148 = pneg %p96
        $region18: #{tpu_custom_call.1} parent=11 // pred_check_branch
          %150 = sbr.rel (%p148) target = $region20
        $region19: #{tpu_custom_call.1} parent=11 // pred_region
          %s152 = ssub.s32 16, 16
          %153 = vsyncadd [#allocation5], %s152
          %s155 = sshll.u32 %s2, 4
          %s156 = int_to_ptr.vmem [resolvable:$true] %s155
          %158 = dma.vmem_to_smem %s156, 16, [#allocation7], [#allocation5]
        $region20: #{tpu_custom_call.1} parent=11 // pred_fallthru
          _
      $region12: #{tpu_custom_call.1} parent=5 // pred_fallthru
        _
      %p159 = scmp.lt.s32.totalorder %s14, 2
      // Predicated region
      $region21: #{tpu_custom_call.1} parent=5 // pred_check
        %p160 = pneg %p159
      $region22: #{tpu_custom_call.1} parent=5 // pred_check_branch
        %162 = sbr.rel (%p160) target = $region24
      $region23: #{tpu_custom_call.1} parent=5 // pred_region
        // Predicated region
        $region25: #{tpu_custom_call.1} parent=23 // pred_check
          %p163 = pneg %p48
        $region26: #{tpu_custom_call.1} parent=23 // pred_check_branch
          %165 = sbr.rel (%p163) target = $region28
        $region27: #{tpu_custom_call.1} parent=23 // pred_region
          %s166 = sand.u32 %s38, 1
          %s167 = scalar_lea.sflag [#allocation3], %s166
          %s168 = sand.u32 %s38, 1
          %s169 = smul.addr %s168, 8
          %s170 = scalar_lea.vmem [#allocation2], %s169
          %s171 = smul.u32 2, %s22
          %s173 = ssub.s32 128, 128
          %174 = vsyncadd %s167, %s173
          %s175 = smul.addr %s21, 2
          %s176 = sadd.s32 %s171, %s175
          %s177 = smul.addr %s176, 64
          %s178 = scalar_lea.hbm %s0, %s177
          %s180 = sshll.u32 %s170, 4
          %s181 = int_to_ptr.vmem [resolvable:$true] %s180
          %183 = dma.hbm_to_vmem [thread:$0]  %s178, 128, %s181, %s167
        $region28: #{tpu_custom_call.1} parent=23 // pred_fallthru
          _
      $region24: #{tpu_custom_call.1} parent=5 // pred_fallthru
        _
      %p184 = scmp.le.s32.totalorder 1, %s14
      %p185 = scmp.lt.s32.totalorder %s14, 3
      %p186 = pnand %p184, %p185
      %p187 = pneg %p186
      // Predicated region
      $region29: #{tpu_custom_call.1} parent=5 // pred_check
        _
      $region30: #{tpu_custom_call.1} parent=5 // pred_check_branch
        %189 = sbr.rel (%p186) target = $region32
      $region31: #{tpu_custom_call.1} parent=5 // pred_region
        %s190 = ssub.s32 %s14, 1
        %s191 = sand.u32 %s41, 1
        %s192 = scalar_lea.sflag [#allocation3], %s191
        %s193 = sand.u32 %s41, 1
        %s194 = smul.addr %s193, 8
        %s195 = scalar_lea.vmem [#allocation2], %s194
        // Predicated region
        $region33: #{tpu_custom_call.1} parent=31 // pred_check
          %p196 = pneg %p54
        $region34: #{tpu_custom_call.1} parent=31 // pred_check_branch
          %198 = sbr.rel (%p196) target = $region36
        $region35: #{tpu_custom_call.1} parent=31 // pred_region
          %199 = dma.done %s192, 128
        $region36: #{tpu_custom_call.1} parent=31 // pred_fallthru
          _
        // Predicated region
        $region37: #{tpu_custom_call.1} parent=31 // pred_check
          %p200 = pneg %p75
        $region38: #{tpu_custom_call.1} parent=31 // pred_check_branch
          %202 = sbr.rel (%p200) target = $region40
        $region39: #{tpu_custom_call.1} parent=31 // pred_region
          %203 = dma.done [#allocation4], 64
        $region40: #{tpu_custom_call.1} parent=31 // pred_fallthru
          _
        // Predicated region
        $region41: #{tpu_custom_call.1} parent=31 // pred_check
          %p204 = pneg %p96
        $region42: #{tpu_custom_call.1} parent=31 // pred_check_branch
          %206 = sbr.rel (%p204) target = $region44
        $region43: #{tpu_custom_call.1} parent=31 // pred_region
          %207 = dma.done [#allocation5], 16
        $region44: #{tpu_custom_call.1} parent=31 // pred_fallthru
          _
        %208 = sfence
        %s209 = sand.u32 %s41, 1
        %s210 = scalar_lea.sflag [#allocation3], %s209
        %s211 = sand.u32 %s41, 1
        %s212 = smul.addr %s211, 8
        %s213 = scalar_lea.vmem [#allocation2], %s212
        %p214 = pneg %p54
        %p215 = pneg %p51
        %p216 = pneg %p75
        %p217 = pneg %p72
        %p218 = pneg %p96
        %p219 = pneg %p93
        %p220 = pneg %p124
        %p221 = pneg %p121
        %s222 = smul.u32 2, %s24
        %p223 = scmp.lt.s32.totalorder %s23, 1
        %s224 = scalar_select %p223, %s23, 1
        %p225 = scmp.lt.s32.totalorder %s222, 1
        %s226 = scalar_select %p225, %s222, 1
        %s227 = smul.addr %s224, 2
        %s228 = sadd.s32 %s226, %s227
        %s229 = smul.addr %s228, 4
        %s230 = scalar_lea.vmem %s3, %s229
        %s231 = smul.u32 2, %s24
        %s232 = smul.u32 2, %s24
        %p233 = scmp.lt.s32.totalorder %s23, 1
        %s234 = scalar_select %p233, %s23, 1
        %p235 = scmp.lt.s32.totalorder %s232, 1
        %s236 = scalar_select %p235, %s232, 1
        %s237 = smul.addr %s234, 2
        %s238 = sadd.s32 %s236, %s237
        %s239 = smul.addr %s238, 4
        %s240 = scalar_lea.vmem %s3, %s239
        %s241 = smul.u32 2, %s24
        %v242 = vld [vmem:[%s195] ss:$4 sm:$0x3]
        %s243 = sld [smem:[#allocation6]]
        %v244 = vstv %s243
        %v245 = vmul.f32 %v242, %v244
        %s246 = scalar_lea.vmem %s195, 1 [#allocation2]
        %v247 = vld [vmem:[%s246] ss:$4 sm:$0x3]
        %s248 = sld [smem:[#allocation6 + $0x1]]
        %v249 = vstv %s248
        %v250 = vmul.f32 %v247, %v249
        %v251 = vadd.f32 %v245, %v250
        %s252 = scalar_lea.vmem %s195, 2 [#allocation2]
        %v253 = vld [vmem:[%s252] ss:$4 sm:$0x3]
        %s254 = sld [smem:[#allocation6 + $0x2]]
        %v255 = vstv %s254
        %v256 = vmul.f32 %v253, %v255
        %v257 = vadd.f32 %v251, %v256
        %s258 = scalar_lea.vmem %s195, 3 [#allocation2]
        %v259 = vld [vmem:[%s258] ss:$4 sm:$0x3]
        %s260 = sld [smem:[#allocation6 + $0x3]]
        %v261 = vstv %s260
        %v262 = vmul.f32 %v259, %v261
        %v263 = vadd.f32 %v257, %v262
        %s264 = sld [smem:[#allocation7]]
        %v265 = vstv %s264
        %v266 = vadd.f32 %v263, %v265
        %v267 = vmax.f32 %v266, 0.0
        %v268 = vlaneseq
        %vm269 = vcmp.ge.s32.totalorder %v268, 0
        %vm270 = vcmp.lt.s32.totalorder %v268, 256
        %vm271 = vmand %vm269, %vm270
        %272 = vst.msk [vmem:[%s240] ss:$4 sm:$0x3] %vm271, %v267
        %v273 = vld [vmem:[%s195] ss:$4 sm:$0x3]
        %s274 = sld [smem:[#allocation6 + $0x80]]
        %v275 = vstv %s274
        %v276 = vmul.f32 %v273, %v275
        %v277 = vld [vmem:[%s246] ss:$4 sm:$0x3]
        %s278 = sld [smem:[#allocation6 + $0x81]]
        %v279 = vstv %s278
        %v280 = vmul.f32 %v277, %v279
        %v281 = vadd.f32 %v276, %v280
        %v282 = vld [vmem:[%s252] ss:$4 sm:$0x3]
        %s283 = sld [smem:[#allocation6 + $0x82]]
        %v284 = vstv %s283
        %v285 = vmul.f32 %v282, %v284
        %v286 = vadd.f32 %v281, %v285
        %v287 = vld [vmem:[%s258] ss:$4 sm:$0x3]
        %s288 = sld [smem:[#allocation6 + $0x83]]
        %v289 = vstv %s288
        %v290 = vmul.f32 %v287, %v289
        %v291 = vadd.f32 %v286, %v290
        %s292 = sld [smem:[#allocation7 + $0x1]]
        %v293 = vstv %s292
        %v294 = vadd.f32 %v291, %v293
        %v295 = vmax.f32 %v294, 0.0
        %s296 = scalar_lea.vmem %s240, 1
        %297 = vst.msk [vmem:[%s296] ss:$4 sm:$0x3] %vm271, %v295
        %v298 = vld [vmem:[%s195] ss:$4 sm:$0x3]
        %s299 = sld [smem:[#allocation6 + $0x100]]
        %v300 = vstv %s299
        %v301 = vmul.f32 %v298, %v300
        %v302 = vld [vmem:[%s246] ss:$4 sm:$0x3]
        %s303 = sld [smem:[#allocation6 + $0x101]]
        %v304 = vstv %s303
        %v305 = vmul.f32 %v302, %v304
        %v306 = vadd.f32 %v301, %v305
        %v307 = vld [vmem:[%s252] ss:$4 sm:$0x3]
        %s308 = sld [smem:[#allocation6 + $0x102]]
        %v309 = vstv %s308
        %v310 = vmul.f32 %v307, %v309
        %v311 = vadd.f32 %v306, %v310
        %v312 = vld [vmem:[%s258] ss:$4 sm:$0x3]
        %s313 = sld [smem:[#allocation6 + $0x103]]
        %v314 = vstv %s313
        %v315 = vmul.f32 %v312, %v314
        %v316 = vadd.f32 %v311, %v315
        %s317 = sld [smem:[#allocation7 + $0x2]]
        %v318 = vstv %s317
        %v319 = vadd.f32 %v316, %v318
        %v320 = vmax.f32 %v319, 0.0
        %s321 = scalar_lea.vmem %s240, 2
        %322 = vst.msk [vmem:[%s321] ss:$4 sm:$0x3] %vm271, %v320
        %s323 = smul.u32 2, %s24
        %p324 = scmp.lt.s32.totalorder %s23, 1
        %s325 = scalar_select %p324, %s23, 1
        %p326 = scmp.lt.s32.totalorder %s323, 1
        %s327 = scalar_select %p326, %s323, 1
        %s328 = smul.addr %s325, 2
        %s329 = sadd.s32 %s327, %s328
        %s330 = smul.addr %s329, 4
        %s331 = scalar_lea.vmem %s3, %s330
        // Predicated region
        $region45: #{tpu_custom_call.1} parent=31 // pred_check
          %p332 = pneg %p121
        $region46: #{tpu_custom_call.1} parent=31 // pred_check_branch
          %334 = sbr.rel (%p332) target = $region48
        $region47: #{tpu_custom_call.1} parent=31 // pred_region
          %s335 = smul.u32 2, %s24
        $region48: #{tpu_custom_call.1} parent=31 // pred_fallthru
          _
      $region32: #{tpu_custom_call.1} parent=5 // pred_fallthru
        _
      %p336 = scmp.le.s32.totalorder 2, %s14
      // Predicated region
      $region49: #{tpu_custom_call.1} parent=5 // pred_check
        %p337 = pneg %p336
      $region50: #{tpu_custom_call.1} parent=5 // pred_check_branch
        %339 = sbr.rel (%p337) target = $region52
      $region51: #{tpu_custom_call.1} parent=5 // pred_region
        %s340 = ssub.s32 %s14, 2
        // Predicated region
        $region53: #{tpu_custom_call.1} parent=51 // pred_check
          %p341 = pneg %p127
        $region54: #{tpu_custom_call.1} parent=51 // pred_check_branch
          %343 = sbr.rel (%p341) target = $region56
        $region55: #{tpu_custom_call.1} parent=51 // pred_region
          %s344 = smul.u32 2, %s26
          %p345 = scmp.lt.s32.totalorder %s25, 1
          %s346 = scalar_select %p345, %s25, 1
          %p347 = scmp.lt.s32.totalorder %s344, 1
          %s348 = scalar_select %p347, %s344, 1
          %s349 = smul.addr %s346, 2
          %s350 = sadd.s32 %s348, %s349
          %s351 = smul.addr %s350, 4
          %s352 = scalar_lea.vmem %s3, %s351
        $region56: #{tpu_custom_call.1} parent=51 // pred_fallthru
          _
      $region52: #{tpu_custom_call.1} parent=5 // pred_fallthru
        _
    $region6: #{tpu_custom_call.1} parent=1 // loop_footer
      %s18 = sadd.s32 1, %s14
    $region7: #{tpu_custom_call.1} parent=1 // loop_footer_branch
      %13 = sbr.rel target = $region3
    $region8: #{tpu_custom_call.1} parent=1 // loop_exit
      _
    %353 = vsyncpa [#allocation3], 1
    %s354 = scalar_lea.sflag [#allocation3], 1
    %355 = vsyncpa %s354, 1
    %356 = vsyncpa [#allocation4], 1
    %s357 = scalar_lea.sflag [#allocation4], 1
    %358 = vsyncpa %s357, 1
    %359 = vsyncpa [#allocation5], 1
    %s360 = scalar_lea.sflag [#allocation5], 1
    %361 = vsyncpa %s360, 1

</llo_original>
